<compile_context>
chip_gen: v7x
topology: tpu7x:2x2x1
jax: 0.10.0
libtpu: 0.0.40
codegen_flags: <defaults>
</compile_context>

<pallas_src>
import math
from functools import partial

import jax
import jax.numpy as jnp
from jax.experimental import pallas as pl
from jax.experimental.pallas import tpu as pltpu


def _cdiv(a, b):
    return -(-a // b)


def _round_up(v, m):
    return ((v + m - 1) // m) * m


def _vae_kernel(x_ref, w1_ref, b1_ref, w2t_ref, b2_ref,
                w3t_ref, b3_ref, w4_ref, b4_ref,
                latent_ref, recons_ref):
    # x_ref: (1, TM) -- rows of txt on the lane axis.
    x = x_ref[...]

    # ----- Encoder -----
    # Linear(1, H/2): in_features == 1 -> broadcasted outer product on the VPU.
    #   (H2, 1) * (1, TM) + (H2, 1) -> (H2, TM)
    h1 = jnp.maximum(w1_ref[...] * x + b1_ref[...], 0.0)

    # Linear(H/2, H): (H, H2) @ (H2, TM) -> (H, TM) on the MXU, f32 accumulate.
    latent = jnp.dot(w2t_ref[...], h1,
                     preferred_element_type=jnp.float32) + b2_ref[...]
    # NOTE: on v6e/v7x this store could be bf16 to halve the dominant HBM
    # writeback; kept f32 to match the PyTorch module's dtype exactly.
    latent_ref[...] = latent.astype(latent_ref.dtype)

    # ----- Decoder -----
    # Linear(H, H/2): (H2, H) @ (H, TM) -> (H2, TM).
    d1 = jnp.maximum(
        jnp.dot(w3t_ref[...], latent,
                preferred_element_type=jnp.float32) + b3_ref[...], 0.0)

    # Linear(H/2, 1): sublane reduction over H2 (VPU+XLU, keeps the MXU free),
    # scalar bias read from SMEM.
    recons = jnp.sum(d1 * w4_ref[...], axis=0, keepdims=True) + b4_ref[0]
    recons_ref[...] = recons.astype(recons_ref.dtype)


@partial(jax.jit, static_argnames=("tm_max",))
def vae_forward(txt, params, *, tm_max=16384):
    """txt: (..., 1) float32.  Returns (latent_rep (..., H), recons_txt (..., 1))."""
    w1, b1, w2, b2, w3, b3, w4, b4 = params
    h2, hidden_dim = w2.shape            # (H/2, H)
    lead_shape = txt.shape[:-1]
    n = math.prod(lead_shape) if lead_shape else 1

    # Feature-major input: rows on the lane axis.  txt's last dim is 1, so this
    # reshape is a free bitcast (no transpose).
    x_row = txt.reshape(1, n).astype(jnp.float32)           # (1, N)

    # Tile choice: as large as possible (amortize per-step pipeline overhead),
    # lane-aligned, and with padding waste bounded by 128 rows per tile.
    n_tiles = max(1, _cdiv(n, tm_max))
    tm = _round_up(_cdiv(n, n_tiles), 128)
    n_pad = n_tiles * tm
    if n_pad != n:
        x_row = jnp.pad(x_row, ((0, 0), (0, n_pad - n)))

    # Weights/biases in feature-major (column) form.
    w1c = w1.reshape(h2, 1)        # Encoder Linear(1, H/2) weight, (H2, 1)
    b1c = b1.reshape(h2, 1)
    w2t = w2.T                     # (H, H2)
    b2c = b2.reshape(hidden_dim, 1)
    w3t = w3.T                     # (H2, H)
    b3c = b3.reshape(h2, 1)
    w4c = w4.reshape(h2, 1)        # Decoder Linear(H/2, 1) weight, (H2, 1)
    b4s = b4.reshape(1)            # scalar bias -> SMEM

    def row_spec(rows):
        return pl.BlockSpec((rows, tm), lambda i: (0, i))

    def const_spec(shape):
        # Constant index_map: block stays resident in VMEM across grid steps.
        return pl.BlockSpec(shape, lambda i: (0, 0))

    grid = (n_pad // tm,)

    # Advisory cost hint for XLA's scheduler around the custom call.
    flops = 2 * n_pad * (2 * h2 * hidden_dim + 2 * h2)
    bytes_accessed = 4 * (n_pad * (1 + hidden_dim + 1)
                          + 2 * h2 + 2 * h2 * hidden_dim + hidden_dim + h2 + 1)
    cost = pl.CostEstimate(flops=flops, transcendentals=0,
                           bytes_accessed=bytes_accessed)

    latent_t, recons_t = pl.pallas_call(
        _vae_kernel,
        out_shape=(
            jax.ShapeDtypeStruct((hidden_dim, n_pad), jnp.float32),
            jax.ShapeDtypeStruct((1, n_pad), jnp.float32),
        ),
        grid=grid,
        in_specs=[
            row_spec(1),                                  # xT tile (1, TM)
            const_spec((h2, 1)),                          # w1 (resident)
            const_spec((h2, 1)),                          # b1
            const_spec((hidden_dim, h2)),                 # w2^T
            const_spec((hidden_dim, 1)),                  # b2
            const_spec((h2, hidden_dim)),                 # w3^T
            const_spec((h2, 1)),                          # b3
            const_spec((h2, 1)),                          # w4
            pl.BlockSpec(memory_space=pltpu.MemorySpace.SMEM),  # b4 scalar
        ],
        out_specs=(
            pl.BlockSpec((hidden_dim, tm), lambda i: (0, i)),   # latent^T tile
            pl.BlockSpec((1, tm), lambda i: (0, i)),            # recons^T tile
        ),
        compiler_params=pltpu.CompilerParams(
            dimension_semantics=("parallel",),
            vmem_limit_bytes=32 * 1024 * 1024,
        ),
        cost_estimate=cost,
    )(x_row, w1c, b1c, w2t, b2c, w3t, b3c, w4c, b4s)

    # Layout plumbing back to the PyTorch output shapes (fused by XLA under jit).
    latent = latent_t[:, :n].T.reshape(*lead_shape, hidden_dim)
    recons = recons_t[0, :n].reshape(*lead_shape, 1)
    return latent, recons


def init_vae_params(key, hidden_dim):
    """Deterministic init mimicking PyTorch nn.Linear default (U(-1/sqrt(fan_in), +))."""
    h2 = hidden_dim // 2
    ks = jax.random.split(key, 8)

    def lin(kw, kb, fan_in, fan_out):
        bound = 1.0 / (fan_in ** 0.5)
        w = jax.random.uniform(kw, (fan_in, fan_out), jnp.float32, -bound, bound)
        b = jax.random.uniform(kb, (fan_out,), jnp.float32, -bound, bound)
        return w, b

    w1, b1 = lin(ks[0], ks[1], 1, h2)           # Encoder Linear(1, H/2)
    w2, b2 = lin(ks[2], ks[3], h2, hidden_dim)  # Encoder Linear(H/2, H)
    w3, b3 = lin(ks[4], ks[5], hidden_dim, h2)  # Decoder Linear(H, H/2)
    w4, b4 = lin(ks[6], ks[7], h2, 1)           # Decoder Linear(H/2, 1)
    return (w1, b1, w2, b2, w3, b3, w4, b4)


def _reference_forward(txt, params):
    """Pure-JAX reference for correctness check."""
    w1, b1, w2, b2, w3, b3, w4, b4 = params
    h1 = jnp.maximum(txt @ w1 + b1, 0.0)
    latent = h1 @ w2 + b2
    d1 = jnp.maximum(latent @ w3 + b3, 0.0)
    recons = d1 @ w4 + b4
    return latent, recons


if __name__ == "__main__":
    hidden_dim = 32
    batch, seq = 2, 8

    key = jax.random.PRNGKey(0)
    k_params, k_x = jax.random.split(key)
    params = init_vae_params(k_params, hidden_dim)
    txt = jax.random.normal(k_x, (batch, seq, 1), dtype=jnp.float32)

    latent, recons = vae_forward(txt, params)
    latent = jax.block_until_ready(latent)
    recons = jax.block_until_ready(recons)

    # sanity check vs pure-JAX reference
    ref_latent, ref_recons = _reference_forward(txt, params)
    assert latent.shape == (batch, seq, hidden_dim)
    assert recons.shape == (batch, seq, 1)
    assert jnp.allclose(latent, ref_latent, atol=1e-4, rtol=1e-4)
    assert jnp.allclose(recons, ref_recons, atol=1e-4, rtol=1e-4)

    print("KERNEL_OK")
</pallas_src>

<mosaic_0001>
module attributes {stable_mosaic.version = 11 : i64} {
  func.func @_vae_kernel(%arg0: i32, %arg1: memref<1x128xf32, #tpu.memory_space<vmem>>, %arg2: memref<16x1xf32, #tpu.memory_space<vmem>>, %arg3: memref<16x1xf32, #tpu.memory_space<vmem>>, %arg4: memref<32x16xf32, #tpu.memory_space<vmem>>, %arg5: memref<32x1xf32, #tpu.memory_space<vmem>>, %arg6: memref<16x32xf32, #tpu.memory_space<vmem>>, %arg7: memref<16x1xf32, #tpu.memory_space<vmem>>, %arg8: memref<16x1xf32, #tpu.memory_space<vmem>>, %arg9: memref<1xf32, #tpu.memory_space<smem>>, %arg10: memref<32x128xf32, #tpu.memory_space<vmem>>, %arg11: memref<1x128xf32, #tpu.memory_space<vmem>>) attributes {dimension_semantics = [#tpu.dimension_semantics<parallel>], iteration_bounds = array<i64: 1>, scalar_prefetch = 0 : i64, scratch_operands = 0 : i64, tpu.core_type = #tpu.core_type<tc>, window_params = [{transform_indices = @transform_0, window_bounds = array<i64: 1, 128>}, {pipeline_mode = #tpu.pipeline_mode<synchronous>, transform_indices = @transform_1, window_bounds = array<i64: 16, 1>}, {pipeline_mode = #tpu.pipeline_mode<synchronous>, transform_indices = @transform_2, window_bounds = array<i64: 16, 1>}, {pipeline_mode = #tpu.pipeline_mode<synchronous>, transform_indices = @transform_3, window_bounds = array<i64: 32, 16>}, {pipeline_mode = #tpu.pipeline_mode<synchronous>, transform_indices = @transform_4, window_bounds = array<i64: 32, 1>}, {pipeline_mode = #tpu.pipeline_mode<synchronous>, transform_indices = @transform_5, window_bounds = array<i64: 16, 32>}, {pipeline_mode = #tpu.pipeline_mode<synchronous>, transform_indices = @transform_6, window_bounds = array<i64: 16, 1>}, {pipeline_mode = #tpu.pipeline_mode<synchronous>, transform_indices = @transform_7, window_bounds = array<i64: 16, 1>}, {transform_indices = @transform_8, window_bounds = array<i64: 1>}, {transform_indices = @transform_9, window_bounds = array<i64: 32, 128>}, {transform_indices = @transform_10, window_bounds = array<i64: 1, 128>}]} {
    %c0 = arith.constant 0 : index
    %c0_0 = arith.constant 0 : index
    %0 = vector.load %arg1[%c0, %c0_0] : memref<1x128xf32, #tpu.memory_space<vmem>>, vector<1x128xf32>
    %c0_1 = arith.constant 0 : index
    %c0_2 = arith.constant 0 : index
    %1 = vector.load %arg2[%c0_1, %c0_2] : memref<16x1xf32, #tpu.memory_space<vmem>>, vector<16x1xf32>
    %2 = vector.broadcast %1 : vector<16x1xf32> to vector<16x128xf32>
    %3 = vector.broadcast %0 : vector<1x128xf32> to vector<16x128xf32>
    %4 = arith.mulf %2, %3 : vector<16x128xf32>
    %c0_3 = arith.constant 0 : index
    %c0_4 = arith.constant 0 : index
    %5 = vector.load %arg3[%c0_3, %c0_4] : memref<16x1xf32, #tpu.memory_space<vmem>>, vector<16x1xf32>
    %6 = vector.broadcast %5 : vector<16x1xf32> to vector<16x128xf32>
    %7 = arith.addf %4, %6 : vector<16x128xf32>
    %cst = arith.constant 0.000000e+00 : f32
    %8 = vector.broadcast %cst : f32 to vector<16x128xf32>
    %9 = arith.maximumf %7, %8 : vector<16x128xf32>
    %c0_5 = arith.constant 0 : index
    %c0_6 = arith.constant 0 : index
    %10 = vector.load %arg4[%c0_5, %c0_6] : memref<32x16xf32, #tpu.memory_space<vmem>>, vector<32x16xf32>
    %cst_7 = arith.constant dense<0.000000e+00> : vector<32x128xf32>
    %11 = tpu.matmul %10, %9, %cst_7 {dimension_numbers = #tpu.dot_dimension_numbers<[1], [0], [0], [1], [0, 0, 1, 1], [], []>} : vector<32x16xf32>, vector<16x128xf32>, vector<32x128xf32> -> vector<32x128xf32>
    %c0_8 = arith.constant 0 : index
    %c0_9 = arith.constant 0 : index
    %12 = vector.load %arg5[%c0_8, %c0_9] : memref<32x1xf32, #tpu.memory_space<vmem>>, vector<32x1xf32>
    %13 = vector.broadcast %12 : vector<32x1xf32> to vector<32x128xf32>
    %14 = arith.addf %11, %13 : vector<32x128xf32>
    %c0_10 = arith.constant 0 : index
    %c0_11 = arith.constant 0 : index
    %15 = vector.load %arg10[%c0_10, %c0_11] : memref<32x128xf32, #tpu.memory_space<vmem>>, vector<32x128xf32>
    tpu.vector_store %arg10[%c0_10, %c0_11], %14 {strides = array<i32>} : memref<32x128xf32, #tpu.memory_space<vmem>>, vector<32x128xf32>,
    %c0_12 = arith.constant 0 : index
    %c0_13 = arith.constant 0 : index
    %16 = vector.load %arg6[%c0_12, %c0_13] : memref<16x32xf32, #tpu.memory_space<vmem>>, vector<16x32xf32>
    %cst_14 = arith.constant dense<0.000000e+00> : vector<16x128xf32>
    %17 = tpu.matmul %16, %14, %cst_14 {dimension_numbers = #tpu.dot_dimension_numbers<[1], [0], [0], [1], [0, 0, 1, 1], [], []>} : vector<16x32xf32>, vector<32x128xf32>, vector<16x128xf32> -> vector<16x128xf32>
    %c0_15 = arith.constant 0 : index
    %c0_16 = arith.constant 0 : index
    %18 = vector.load %arg7[%c0_15, %c0_16] : memref<16x1xf32, #tpu.memory_space<vmem>>, vector<16x1xf32>
    %19 = vector.broadcast %18 : vector<16x1xf32> to vector<16x128xf32>
    %20 = arith.addf %17, %19 : vector<16x128xf32>
    %cst_17 = arith.constant 0.000000e+00 : f32
    %21 = vector.broadcast %cst_17 : f32 to vector<16x128xf32>
    %22 = arith.maximumf %20, %21 : vector<16x128xf32>
    %c0_18 = arith.constant 0 : index
    %c0_19 = arith.constant 0 : index
    %23 = vector.load %arg8[%c0_18, %c0_19] : memref<16x1xf32, #tpu.memory_space<vmem>>, vector<16x1xf32>
    %24 = vector.broadcast %23 : vector<16x1xf32> to vector<16x128xf32>
    %25 = arith.mulf %22, %24 : vector<16x128xf32>
    %cst_20 = arith.constant dense<0.000000e+00> : vector<128xf32>
    %26 = vector.multi_reduction <add>, %25, %cst_20 [0] : vector<16x128xf32> to vector<128xf32>
    %27 = vector.shape_cast %26 : vector<128xf32> to vector<1x128xf32>
    %c0_21 = arith.constant 0 : index
    %28 = memref.load %arg9[%c0_21] : memref<1xf32, #tpu.memory_space<smem>>
    %29 = vector.broadcast %28 : f32 to vector<1x128xf32>
    %30 = arith.addf %27, %29 : vector<1x128xf32>
    %c0_22 = arith.constant 0 : index
    %c0_23 = arith.constant 0 : index
    %31 = vector.load %arg11[%c0_22, %c0_23] : memref<1x128xf32, #tpu.memory_space<vmem>>, vector<1x128xf32>
    tpu.vector_store %arg11[%c0_22, %c0_23], %30 {strides = array<i32>} : memref<1x128xf32, #tpu.memory_space<vmem>>, vector<1x128xf32>,
    return
  }
  func.func @transform_0(%arg0: i32) -> (i32, i32) {
    %c0_i32 = arith.constant 0 : i32
    %c0_i32_0 = arith.constant 0 : i32
    return %c0_i32, %arg0 : i32, i32
  }
  func.func @transform_1(%arg0: i32) -> (i32, i32) {
    %c0_i32 = arith.constant 0 : i32
    %c0_i32_0 = arith.constant 0 : i32
    %c0_i32_1 = arith.constant 0 : i32
    return %c0_i32, %c0_i32_0 : i32, i32
  }
  func.func @transform_2(%arg0: i32) -> (i32, i32) {
    %c0_i32 = arith.constant 0 : i32
    %c0_i32_0 = arith.constant 0 : i32
    %c0_i32_1 = arith.constant 0 : i32
    return %c0_i32, %c0_i32_0 : i32, i32
  }
  func.func @transform_3(%arg0: i32) -> (i32, i32) {
    %c0_i32 = arith.constant 0 : i32
    %c0_i32_0 = arith.constant 0 : i32
    %c0_i32_1 = arith.constant 0 : i32
    return %c0_i32, %c0_i32_0 : i32, i32
  }
  func.func @transform_4(%arg0: i32) -> (i32, i32) {
    %c0_i32 = arith.constant 0 : i32
    %c0_i32_0 = arith.constant 0 : i32
    %c0_i32_1 = arith.constant 0 : i32
    return %c0_i32, %c0_i32_0 : i32, i32
  }
  func.func @transform_5(%arg0: i32) -> (i32, i32) {
    %c0_i32 = arith.constant 0 : i32
    %c0_i32_0 = arith.constant 0 : i32
    %c0_i32_1 = arith.constant 0 : i32
    return %c0_i32, %c0_i32_0 : i32, i32
  }
  func.func @transform_6(%arg0: i32) -> (i32, i32) {
    %c0_i32 = arith.constant 0 : i32
    %c0_i32_0 = arith.constant 0 : i32
    %c0_i32_1 = arith.constant 0 : i32
    return %c0_i32, %c0_i32_0 : i32, i32
  }
  func.func @transform_7(%arg0: i32) -> (i32, i32) {
    %c0_i32 = arith.constant 0 : i32
    %c0_i32_0 = arith.constant 0 : i32
    %c0_i32_1 = arith.constant 0 : i32
    return %c0_i32, %c0_i32_0 : i32, i32
  }
  func.func @transform_8(%arg0: i32) -> i32 {
    %c0_i32 = arith.constant 0 : i32
    %c0_i32_0 = arith.constant 0 : i32
    return %c0_i32 : i32
  }
  func.func @transform_9(%arg0: i32) -> (i32, i32) {
    %c0_i32 = arith.constant 0 : i32
    %c0_i32_0 = arith.constant 0 : i32
    return %c0_i32, %arg0 : i32, i32
  }
  func.func @transform_10(%arg0: i32) -> (i32, i32) {
    %c0_i32 = arith.constant 0 : i32
    %c0_i32_0 = arith.constant 0 : i32
    return %c0_i32, %arg0 : i32, i32
  }
}

</mosaic_0001>

<llo_original>
// kernel: squeeze.1
$region0: #{squeeze.1}
  %s0 = inlined_call_operand.vmem [shape: f32[16], index: 0, kind: input, shape index: {}]
  %s1 = inlined_call_operand.hbm [shape: f32[2,8,1], index: 1, kind: output, shape index: {}]
  $region1: #{squeeze.1} parent=0
    #allocation0 [shape = 'u8[1024]{0}', space=vmem, size = 0x400, scoped, tag = 'operand span for operand 1']
    #allocation1 [shape = 's32[1]{0}', space=sflag, size = 0x4, scoped, tag = 'scoped memory for squeeze.1']
    #allocation2 [shape = 'u8[4096]{0}', space=vmem, size = 0x1000, scoped, tag = 'scoped mem for output reshape']
    #allocation3 [shape = 'u8[4096]{0}', space=vmem, size = 0x1000, scoped, tag = 'scoped mem for input reshape']
    %2 = vsyncpa [#allocation1], 0
    %s4 = sshllo.u32 0, 1
    %v5 = vld [vmem:[%s0] sm:%s4]
    %6 = vst [vmem:[#allocation3] sm:%s4] %v5
    %v7 = vld [vmem:[#allocation3] sm:$0x1]
    %vm8 = vcmask 64512
    %9 = vst.msk [vmem:[#allocation2] sm:$0x1] %vm8, %v7
    %v10 = vld [vmem:[#allocation3] sm:$0x1]
    %11 = vrot.lane.b32.xlu0 %v10, 120
    %v12 = vpop.permute.xlu0 %11
    %vm13 = vcmask 64512
    %s14 = scalar_lea.vmem [#allocation2], 1
    %15 = vst.msk [vmem:[%s14] sm:$0x1] %vm13, %v12
    %s17 = sshllo.u32 0, 2
    %v19 = vld [vmem:[#allocation2] sm:%s17]
    %s20 = sshllo.u32 0, 2
    %21 = vst [vmem:[#allocation0] sm:%s20] %v19
    %s23 = ssub.s32 32, 32
    %24 = vsyncadd [#allocation1], %s23
    %s26 = sshll.u32 [#allocation0], 4
    %s27 = int_to_ptr.vmem [resolvable:$true] %s26
    %29 = dma.vmem_to_hbm [thread:$0]  %s27, 32, %s1, [#allocation1]
    %30 = dma.done [#allocation1], 32
    %31 = vsyncpa [#allocation1], 1

// kernel: vae_forward.1
$region0: #{vae_forward.1}
  #allocation0 [shape = 'u32[]', space=smem, size = 0x4, offset = 0x4, fixed_abs, tag = 'smem constant byte address 0x4 - core index']
  #allocation1 [shape = 'u32[144,128]{1,0:T(1,128)}', space=vmem, size = 0x12000, scoped, tag = 'internal scratch']
  #allocation2 [shape = 'f32[1]{0:T(128)S(6)}', space=smem, size = 0x200, scoped, tag = 'scoped memory for vae_forward.1']
  %s0 = inlined_call_operand.vmem [shape: f32[1,128], index: 0, kind: input, shape index: {}]
  %s1 = inlined_call_operand.vmem [shape: f32[16,1], index: 1, kind: input, shape index: {}]
  %s2 = inlined_call_operand.vmem [shape: f32[16,1], index: 2, kind: input, shape index: {}]
  %s3 = inlined_call_operand.vmem [shape: f32[32,16], index: 3, kind: input, shape index: {}]
  %s4 = inlined_call_operand.vmem [shape: f32[32,1], index: 4, kind: input, shape index: {}]
  %s5 = inlined_call_operand.vmem [shape: f32[16,32], index: 5, kind: input, shape index: {}]
  %s6 = inlined_call_operand.vmem [shape: f32[16,1], index: 6, kind: input, shape index: {}]
  %s7 = inlined_call_operand.vmem [shape: f32[16,1], index: 7, kind: input, shape index: {}]
  %s8 = inlined_call_operand.<no memory space> [shape: f32[1], index: 8, kind: input, shape index: {}]
  %s9 = inlined_call_operand.vmem [shape: f32[32,128], index: 9, kind: output, shape index: {0}]
  %s10 = inlined_call_operand.vmem [shape: f32[1,128], index: 10, kind: output, shape index: {1}]
  %11 = xla_tuple %s9, %s10
  %s12 = sld [smem:[#allocation0]]
  $region54: #{vae_forward.1} parent=0
    _
  %s14 = ssub.s32 1, %s12
  %s15 = scalar_select 0, %s14, %s12
  %16 = sst [smem:[#allocation2]] %s8
  // Predicated region
  $region2: #{vae_forward.1} parent=0 // pred_check
    _
  $region3: #{vae_forward.1} parent=0 // pred_check_branch
    %18 = sbr.rel (0) target = $region5
  $region4: #{vae_forward.1} parent=0 // pred_region
    _
  $region5: #{vae_forward.1} parent=0 // pred_fallthru
    _
  // Predicated region
  $region6: #{vae_forward.1} parent=0 // pred_check
    _
  $region7: #{vae_forward.1} parent=0 // pred_check_branch
    %20 = sbr.rel (0) target = $region9
  $region8: #{vae_forward.1} parent=0 // pred_region
    _
  $region9: #{vae_forward.1} parent=0 // pred_fallthru
    _
  // Predicated region
  $region10: #{vae_forward.1} parent=0 // pred_check
    _
  $region11: #{vae_forward.1} parent=0 // pred_check_branch
    %22 = sbr.rel (0) target = $region13
  $region12: #{vae_forward.1} parent=0 // pred_region
    _
  $region13: #{vae_forward.1} parent=0 // pred_fallthru
    _
  // Predicated region
  $region14: #{vae_forward.1} parent=0 // pred_check
    _
  $region15: #{vae_forward.1} parent=0 // pred_check_branch
    %24 = sbr.rel (0) target = $region17
  $region16: #{vae_forward.1} parent=0 // pred_region
    _
  $region17: #{vae_forward.1} parent=0 // pred_fallthru
    _
  // Predicated region
  $region18: #{vae_forward.1} parent=0 // pred_check
    _
  $region19: #{vae_forward.1} parent=0 // pred_check_branch
    %26 = sbr.rel (0) target = $region21
  $region20: #{vae_forward.1} parent=0 // pred_region
    _
  $region21: #{vae_forward.1} parent=0 // pred_fallthru
    _
  // Predicated region
  $region22: #{vae_forward.1} parent=0 // pred_check
    _
  $region23: #{vae_forward.1} parent=0 // pred_check_branch
    %28 = sbr.rel (0) target = $region25
  $region24: #{vae_forward.1} parent=0 // pred_region
    _
  $region25: #{vae_forward.1} parent=0 // pred_fallthru
    _
  // Predicated region
  $region26: #{vae_forward.1} parent=0 // pred_check
    _
  $region27: #{vae_forward.1} parent=0 // pred_check_branch
    %30 = sbr.rel (0) target = $region29
  $region28: #{vae_forward.1} parent=0 // pred_region
    _
  $region29: #{vae_forward.1} parent=0 // pred_fallthru
    _
  // Predicated region
  $region30: #{vae_forward.1} parent=0 // pred_check
    _
  $region31: #{vae_forward.1} parent=0 // pred_check_branch
    %32 = sbr.rel (0) target = $region33
  $region32: #{vae_forward.1} parent=0 // pred_region
    _
  $region33: #{vae_forward.1} parent=0 // pred_fallthru
    _
  // Predicated region
  $region34: #{vae_forward.1} parent=0 // pred_check
    _
  $region35: #{vae_forward.1} parent=0 // pred_check_branch
    %34 = sbr.rel (0) target = $region37
  $region36: #{vae_forward.1} parent=0 // pred_region
    _
  $region37: #{vae_forward.1} parent=0 // pred_fallthru
    _
  %v35 = vld [vmem:[%s0] sm:$0x1]
  %v36 = vld [vmem:[%s1] sm:$0xff]
  %v37 = vld [vmem:[%s1 + $0x8] sm:$0xff]
  %39 = vset.pattern.permute.xlu0 0
  %40 = vperm.xlu0 %39, %v36
  %v41 = vpop.permute.xlu0 %40
  %44 = vset.pattern.permute.xlu0 0
  %45 = vperm.xlu0 %44, %v37
  %v46 = vpop.permute.xlu0 %45
  %v49 = vlaneseq
  %v50 = vshrl.u32 %v49, 7
  %v51 = vsub.s32 0, %v50
  %v52 = vrot.slane %v35, %v51
  %v54 = vmul.f32 %v41, %v52
  %v55 = vmul.f32 %v46, %v52
  %v56 = vld [vmem:[%s2] sm:$0xff]
  %v57 = vld [vmem:[%s2 + $0x8] sm:$0xff]
  %59 = vset.pattern.permute.xlu0 0
  %60 = vperm.xlu0 %59, %v56
  %v61 = vpop.permute.xlu0 %60
  %64 = vset.pattern.permute.xlu0 0
  %65 = vperm.xlu0 %64, %v57
  %v66 = vpop.permute.xlu0 %65
  %v68 = vadd.f32 %v54, %v61
  %v69 = vadd.f32 %v55, %v66
  %v70 = vmax.f32 %v68, 0.0
  %v71 = vmax.f32 %v69, 0.0
  %v72 = vld [vmem:[%s3] sm:$0xff]
  %v73 = vld [vmem:[%s3 + $0x8] sm:$0xff]
  %v74 = vld [vmem:[%s3 + $0x10] sm:$0xff]
  %v75 = vld [vmem:[%s3 + $0x18] sm:$0xff]
  %v76 = vld [vmem:[%s4] sm:$0xff]
  %v77 = vld [vmem:[%s4 + $0x8] sm:$0xff]
  %v78 = vld [vmem:[%s4 + $0x10] sm:$0xff]
  %v79 = vld [vmem:[%s4 + $0x18] sm:$0xff]
  %81 = vset.pattern.permute.xlu0 0
  %82 = vperm.xlu0 %81, %v76
  %v83 = vpop.permute.xlu0 %82
  %86 = vset.pattern.permute.xlu0 0
  %87 = vperm.xlu0 %86, %v77
  %v88 = vpop.permute.xlu0 %87
  %91 = vset.pattern.permute.xlu0 0
  %92 = vperm.xlu0 %91, %v78
  %v93 = vpop.permute.xlu0 %92
  %96 = vset.pattern.permute.xlu0 0
  %97 = vperm.xlu0 %96, %v79
  %v98 = vpop.permute.xlu0 %97
  %vm100 = vcmask 130048
  %v102 = vsel %vm100, %v72, 0
  %v105 = vsel %vm100, %v73, 0
  %v108 = vsel %vm100, %v74, 0
  %v111 = vsel %vm100, %v75, 0
  %113 = vmatprep.subr.mxu0 0.0
  %114 = vmatpush1.msra.mxu0 %v70
  %115 = vmatprep.subr.mxu0 0.0
  %116 = vmatpush1.msra.mxu0 %v71
  %117 = vmatprep.subr.mxu0 0.0
  %118 = vmatpush1.msra.mxu0 0.0
  %119 = vmatprep.subr.mxu0 0.0
  %120 = vmatpush1.msra.mxu0 0.0
  %121 = vmatprep.subr.mxu0 0.0
  %122 = vmatpush1.msra.mxu0 0.0
  %123 = vmatprep.subr.mxu0 0.0
  %124 = vmatpush1.msra.mxu0 0.0
  %125 = vmatprep.subr.mxu0 0.0
  %126 = vmatpush1.msra.mxu0 0.0
  %127 = vmatprep.subr.mxu0 0.0
  %128 = vmatpush1.msra.mxu0 0.0
  %129 = vmatprep.subr.mxu0 0.0
  %130 = vmatpush1.msra.mxu0 0.0
  %131 = vmatprep.subr.mxu0 0.0
  %132 = vmatpush1.msra.mxu0 0.0
  %133 = vmatprep.subr.mxu0 0.0
  %134 = vmatpush1.msra.mxu0 0.0
  %135 = vmatprep.subr.mxu0 0.0
  %136 = vmatpush1.msra.mxu0 0.0
  %137 = vmatprep.subr.mxu0 0.0
  %138 = vmatpush1.msra.mxu0 0.0
  %139 = vmatprep.subr.mxu0 0.0
  %140 = vmatpush1.msra.mxu0 0.0
  %141 = vmatprep.subr.mxu0 0.0
  %142 = vmatpush1.msra.mxu0 0.0
  %143 = vmatprep.subr.mxu0 0.0
  %144 = vmatpush1.msra.mxu0 0.0
  %145 = vmatprep.subr.mxu0 0.0
  %146 = vmatpush1.msra.mxu0 0.0
  %147 = vmatprep.subr.mxu0 0.0
  %148 = vmatpush1.msra.mxu0 0.0
  %149 = vmatprep.subr.mxu0 0.0
  %150 = vmatpush1.msra.mxu0 0.0
  %151 = vmatprep.subr.mxu0 0.0
  %152 = vmatpush1.msra.mxu0 0.0
  %153 = vmatprep.subr.mxu0 0.0
  %154 = vmatpush1.msra.mxu0 0.0
  %155 = vmatprep.subr.mxu0 0.0
  %156 = vmatpush1.msra.mxu0 0.0
  %157 = vmatprep.subr.mxu0 0.0
  %158 = vmatpush1.msra.mxu0 0.0
  %159 = vmatprep.subr.mxu0 0.0
  %160 = vmatpush1.msra.mxu0 0.0
  %161 = vmatprep.subr.mxu0 0.0
  %162 = vmatpush1.msra.mxu0 0.0
  %163 = vmatprep.subr.mxu0 0.0
  %164 = vmatpush1.msra.mxu0 0.0
  %165 = vmatprep.subr.mxu0 0.0
  %166 = vmatpush1.msra.mxu0 0.0
  %167 = vmatprep.subr.mxu0 0.0
  %168 = vmatpush1.msra.mxu0 0.0
  %169 = vmatprep.subr.mxu0 0.0
  %170 = vmatpush1.msra.mxu0 0.0
  %171 = vmatprep.subr.mxu0 0.0
  %172 = vmatpush1.msra.mxu0 0.0
  %173 = vmatprep.subr.mxu0 0.0
  %174 = vmatpush1.msra.mxu0 0.0
  %175 = vmatprep.subr.mxu0 0.0
  %176 = vmatpush1.msra.mxu0 0.0
  %177 = vmatprep.mubr.f32.mxu0 0.0
  %178 = vmatmul.mubr.f32.gmra.mrb[0].mxu0 %v102
  %v179 = vpop.f32.mrb[0].mxu0
  %v180 = vadd.f32 %v83, %v179
  %v181 = vpop.f32.mrb[0].mxu0
  %182 = vmatprep.mubr.f32.mxu0 0.0
  %183 = vmatmul.mubr.f32.gmra.mrb[0].mxu0 %v105
  %v184 = vpop.f32.mrb[0].mxu0
  %v185 = vadd.f32 %v88, %v184
  %v186 = vpop.f32.mrb[0].mxu0
  %187 = vmatprep.mubr.f32.mxu0 0.0
  %188 = vmatmul.mubr.f32.gmra.mrb[0].mxu0 %v108
  %v189 = vpop.f32.mrb[0].mxu0
  %v190 = vadd.f32 %v93, %v189
  %v191 = vpop.f32.mrb[0].mxu0
  %192 = vmatprep.mubr.f32.mxu0 0.0
  %193 = vmatmul.mubr.f32.gmra.mrb[0].mxu0 %v111
  %v194 = vpop.f32.mrb[0].mxu0
  %v195 = vadd.f32 %v98, %v194
  %v196 = vpop.f32.mrb[0].mxu0
  %197 = vdwg.mxu0
  %198 = vst [vmem:[%s9] sm:$0xff] %v180
  %199 = vst [vmem:[%s9 + $0x8] sm:$0xff] %v185
  %200 = vst [vmem:[%s9 + $0x10] sm:$0xff] %v190
  %201 = vst [vmem:[%s9 + $0x18] sm:$0xff] %v195
  %v202 = vld [vmem:[%s5] sm:$0xff]
  %v203 = vld [vmem:[%s5 + $0x8] sm:$0xff]
  %v204 = vld [vmem:[%s6] sm:$0xff]
  %v205 = vld [vmem:[%s6 + $0x8] sm:$0xff]
  %207 = vset.pattern.permute.xlu0 0
  %208 = vperm.xlu0 %207, %v204
  %v209 = vpop.permute.xlu0 %208
  %212 = vset.pattern.permute.xlu0 0
  %213 = vperm.xlu0 %212, %v205
  %v214 = vpop.permute.xlu0 %213
  %vm216 = vcmask 261120
  %v218 = vsel %vm216, %v202, 0
  %v221 = vsel %vm216, %v203, 0
  %223 = vmatprep.subr.mxu0 0.0
  %224 = vmatpush1.msra.mxu0 %v180
  %225 = vmatprep.subr.mxu0 0.0
  %226 = vmatpush1.msra.mxu0 %v185
  %227 = vmatprep.subr.mxu0 0.0
  %228 = vmatpush1.msra.mxu0 %v190
  %229 = vmatprep.subr.mxu0 0.0
  %230 = vmatpush1.msra.mxu0 %v195
  %231 = vmatprep.subr.mxu0 0.0
  %232 = vmatpush1.msra.mxu0 0.0
  %233 = vmatprep.subr.mxu0 0.0
  %234 = vmatpush1.msra.mxu0 0.0
  %235 = vmatprep.subr.mxu0 0.0
  %236 = vmatpush1.msra.mxu0 0.0
  %237 = vmatprep.subr.mxu0 0.0
  %238 = vmatpush1.msra.mxu0 0.0
  %239 = vmatprep.subr.mxu0 0.0
  %240 = vmatpush1.msra.mxu0 0.0
  %241 = vmatprep.subr.mxu0 0.0
  %242 = vmatpush1.msra.mxu0 0.0
  %243 = vmatprep.subr.mxu0 0.0
  %244 = vmatpush1.msra.mxu0 0.0
  %245 = vmatprep.subr.mxu0 0.0
  %246 = vmatpush1.msra.mxu0 0.0
  %247 = vmatprep.subr.mxu0 0.0
  %248 = vmatpush1.msra.mxu0 0.0
  %249 = vmatprep.subr.mxu0 0.0
  %250 = vmatpush1.msra.mxu0 0.0
  %251 = vmatprep.subr.mxu0 0.0
  %252 = vmatpush1.msra.mxu0 0.0
  %253 = vmatprep.subr.mxu0 0.0
  %254 = vmatpush1.msra.mxu0 0.0
  %255 = vmatprep.subr.mxu0 0.0
  %256 = vmatpush1.msra.mxu0 0.0
  %257 = vmatprep.subr.mxu0 0.0
  %258 = vmatpush1.msra.mxu0 0.0
  %259 = vmatprep.subr.mxu0 0.0
  %260 = vmatpush1.msra.mxu0 0.0
  %261 = vmatprep.subr.mxu0 0.0
  %262 = vmatpush1.msra.mxu0 0.0
  %263 = vmatprep.subr.mxu0 0.0
  %264 = vmatpush1.msra.mxu0 0.0
  %265 = vmatprep.subr.mxu0 0.0
  %266 = vmatpush1.msra.mxu0 0.0
  %267 = vmatprep.subr.mxu0 0.0
  %268 = vmatpush1.msra.mxu0 0.0
  %269 = vmatprep.subr.mxu0 0.0
  %270 = vmatpush1.msra.mxu0 0.0
  %271 = vmatprep.subr.mxu0 0.0
  %272 = vmatpush1.msra.mxu0 0.0
  %273 = vmatprep.subr.mxu0 0.0
  %274 = vmatpush1.msra.mxu0 0.0
  %275 = vmatprep.subr.mxu0 0.0
  %276 = vmatpush1.msra.mxu0 0.0
  %277 = vmatprep.subr.mxu0 0.0
  %278 = vmatpush1.msra.mxu0 0.0
  %279 = vmatprep.subr.mxu0 0.0
  %280 = vmatpush1.msra.mxu0 0.0
  %281 = vmatprep.subr.mxu0 0.0
  %282 = vmatpush1.msra.mxu0 0.0
  %283 = vmatprep.subr.mxu0 0.0
  %284 = vmatpush1.msra.mxu0 0.0
  %285 = vmatprep.subr.mxu0 0.0
  %286 = vmatpush1.msra.mxu0 0.0
  %287 = vmatprep.mubr.f32.mxu0 0.0
  %288 = vmatmul.mubr.f32.gmra.mrb[0].mxu0 %v218
  %v289 = vpop.f32.mrb[0].mxu0
  %v290 = vadd.f32 %v209, %v289
  %v291 = vpop.f32.mrb[0].mxu0
  %292 = vmatprep.mubr.f32.mxu0 0.0
  %293 = vmatmul.mubr.f32.gmra.mrb[0].mxu0 %v221
  %v294 = vpop.f32.mrb[0].mxu0
  %v295 = vadd.f32 %v214, %v294
  %v296 = vpop.f32.mrb[0].mxu0
  %297 = vdwg.mxu0
  %v298 = vmax.f32 %v290, 0.0
  %v299 = vmax.f32 %v295, 0.0
  %v300 = vld [vmem:[%s7] sm:$0xff]
  %v301 = vld [vmem:[%s7 + $0x8] sm:$0xff]
  %303 = vset.pattern.permute.xlu0 0
  %304 = vperm.xlu0 %303, %v300
  %v305 = vpop.permute.xlu0 %304
  %308 = vset.pattern.permute.xlu0 0
  %309 = vperm.xlu0 %308, %v301
  %v310 = vpop.permute.xlu0 %309
  %v312 = vmul.f32 %v298, %v305
  %v313 = vmul.f32 %v299, %v310
  %v314 = vadd.f32 %v312, %v313
  %v315 = vrot.slane %v314, 4
  %v316 = vadd.f32 %v314, %v315
  %v317 = vrot.slane %v316, 2
  %v318 = vadd.f32 %v316, %v317
  %v319 = vrot.slane %v318, 1
  %v320 = vadd.f32 %v318, %v319
  %s321 = sld [smem:[#allocation2]]
  %v322 = vstv %s321
  %v323 = vadd.f32 %v320, %v322
  %324 = vst [vmem:[%s10] sm:$0x1] %v323
  // Predicated region
  $region38: #{vae_forward.1} parent=0 // pred_check
    _
  $region39: #{vae_forward.1} parent=0 // pred_check_branch
    %326 = sbr.rel (0) target = $region41
  $region40: #{vae_forward.1} parent=0 // pred_region
    _
  $region41: #{vae_forward.1} parent=0 // pred_fallthru
    _
  // Predicated region
  $region42: #{vae_forward.1} parent=0 // pred_check
    _
  $region43: #{vae_forward.1} parent=0 // pred_check_branch
    %328 = sbr.rel (0) target = $region45
  $region44: #{vae_forward.1} parent=0 // pred_region
    _
  $region45: #{vae_forward.1} parent=0 // pred_fallthru
    _
  // Predicated region
  $region46: #{vae_forward.1} parent=0 // pred_check
    _
  $region47: #{vae_forward.1} parent=0 // pred_check_branch
    %330 = sbr.rel (0) target = $region49
  $region48: #{vae_forward.1} parent=0 // pred_region
    _
  $region49: #{vae_forward.1} parent=0 // pred_fallthru
    _
  // Predicated region
  $region50: #{vae_forward.1} parent=0 // pred_check
    _
  $region51: #{vae_forward.1} parent=0 // pred_check_branch
    %332 = sbr.rel (0) target = $region53
  $region52: #{vae_forward.1} parent=0 // pred_region
    _
  $region53: #{vae_forward.1} parent=0 // pred_fallthru
    _

</llo_original>
